<compile_context>
chip_gen: v7x
topology: tpu7x:2x2x1
jax: 0.10.0
libtpu: 0.0.40
codegen_flags: <defaults>
</compile_context>

<pallas_src>
import jax
import jax.numpy as jnp
from jax.experimental import pallas as pl
from jax.experimental.pallas import tpu as pltpu


def _residual_block_kernel(x_ref, w1_ref, w2_ref, t_ref, edge_ref, o_ref):
    # x_ref: (C, Lt) slab = Bt whole samples laid out along the lane axis.
    x = x_ref[...].astype(jnp.float32)          # cast in-register (no HBM traffic)
    Lt = x.shape[-1]

    keep_l = edge_ref[0]                         # (1, Lt): 0.0 at per-sample left edges
    keep_r = edge_ref[1]                         # (1, Lt): 0.0 at per-sample right edges

    def conv3(h, w_ref):
        # k=3, stride=1, padding=1 conv as ONE MXU matmul over the stacked
        # (3C, Lt) contraction.  Spatial +-1 shifts via pltpu.roll (XLU slot);
        # per-sample edges zeroed so taps never leak across samples.
        h_m1 = pltpu.roll(h, 1, axis=1) * keep_l          # column l -> h[:, l-1]
        h_p1 = pltpu.roll(h, Lt - 1, axis=1) * keep_r     # column l -> h[:, l+1]
        stacked = jnp.concatenate([h_m1, h, h_p1], axis=0)        # (3C, Lt)
        return jnp.dot(w_ref[...], stacked, preferred_element_type=jnp.float32)

    h = conv3(x, w1_ref)                         # Conv1 (BN1 scale folded into weights)
    h = jnp.maximum(h + t_ref[0], 0.0)           # BN1 shift + ReLU
    h = conv3(h, w2_ref)                         # Conv2 (BN2 scale folded into weights)
    o_ref[...] = (x + h + t_ref[1]).astype(o_ref.dtype)   # BN2 shift + residual add


def fold_residual_block_params(w1, w2, g1, b1, m1, v1, g2, b2, m2, v2, eps=1e-5):
    """One-time parameter preprocessing — run at model-load time, not per call.

    Folds each BatchNorm's scale into the preceding conv's weights and lays the
    3 conv taps along the contraction axis.

    Returns:
      W1, W2: (C, 3C) float32  — columns [w[:,:,0] | w[:,:,1] | w[:,:,2]],
              output channels pre-scaled by gamma / sqrt(var + eps)
      T:      (2, C, 1) float32 — per-channel shifts (BN1, BN2)
    """
    f32 = jnp.float32
    C = w1.shape[0]
    inv1 = g1.astype(f32) * jax.lax.rsqrt(v1.astype(f32) + eps)
    inv2 = g2.astype(f32) * jax.lax.rsqrt(v2.astype(f32) + eps)
    W1 = jnp.concatenate([w1[:, :, 0], w1[:, :, 1], w1[:, :, 2]], axis=1).astype(f32)
    W2 = jnp.concatenate([w2[:, :, 0], w2[:, :, 1], w2[:, :, 2]], axis=1).astype(f32)
    W1 = W1 * inv1[:, None]
    W2 = W2 * inv2[:, None]
    t1 = b1.astype(f32) - m1.astype(f32) * inv1
    t2 = b2.astype(f32) - m2.astype(f32) * inv2
    T = jnp.stack([t1, t2]).reshape(2, C, 1)
    return W1, W2, T


def _pick_batch_tile(B, C, L, itemsize, target_bytes=1 << 20):
    """Largest divisor Bt of B with a ~target-sized, 128-lane-aligned slab."""
    per_sample = max(C * L * itemsize, 1)
    bt = int(max(1, min(B, target_bytes // per_sample)))
    for cand in range(bt, 0, -1):
        if B % cand == 0 and (cand == B or (cand * L) % 128 == 0):
            return cand
    return B


def residual_block_forward(x, W1, W2, T):
    """y = x + BN2(Conv2(ReLU(BN1(Conv1(x))))), eval-mode BN, fully fused.

    x: (B, C, L); W1/W2/T from fold_residual_block_params.

    Layout note: the kernel works channel-major (C, B*L) so the batch sits on
    the lane axis.  For the real molearn network (a stack of such blocks) the
    transpose below is done once around the whole stack; here a single block
    does its own transpose-in/out.
    """
    B, C, L = x.shape
    N = B * L
    x_cm = jnp.transpose(x, (1, 0, 2)).reshape(C, N)   # channel-major, batch in lanes

    Bt = _pick_batch_tile(B, C, L, x.dtype.itemsize)
    Lt = Bt * L
    grid = (N // Lt,)

    # Per-sample boundary masks (identical pattern in every tile since each
    # tile holds whole samples): 0.0 at positions that would read across a
    # sample edge after the +-1 roll, 1.0 elsewhere.
    pos = jnp.arange(Lt) % L
    keep_l = (pos != 0).astype(jnp.float32)
    keep_r = (pos != L - 1).astype(jnp.float32)
    edge = jnp.stack([keep_l, keep_r]).reshape(2, 1, Lt)

    y_cm = pl.pallas_call(
        _residual_block_kernel,
        out_shape=jax.ShapeDtypeStruct((C, N), x.dtype),
        grid=grid,
        in_specs=[
            pl.BlockSpec((C, Lt), lambda i: (0, i)),        # activations: Bt samples/step
            pl.BlockSpec((C, 3 * C), lambda i: (0, 0)),     # conv1 taps (+BN1 scale), invariant
            pl.BlockSpec((C, 3 * C), lambda i: (0, 0)),     # conv2 taps (+BN2 scale), invariant
            pl.BlockSpec((2, C, 1), lambda i: (0, 0, 0)),   # BN shifts, invariant
            pl.BlockSpec((2, 1, Lt), lambda i: (0, 0, 0)),  # edge masks, invariant
        ],
        out_specs=pl.BlockSpec((C, Lt), lambda i: (0, i)),
        compiler_params=pltpu.CompilerParams(
            dimension_semantics=("parallel",),              # split batch tiles over TCs
            vmem_limit_bytes=32 << 20,                      # re-derive for production C / Bt
        ),
    )(x_cm, W1, W2, T, edge)

    return y_cm.reshape(C, B, L).transpose(1, 0, 2)


def _reference(x, w1, w2, g1, b1, m1, v1, g2, b2, m2, v2, eps=1e-5):
    def conv1d(h, w):
        hp = jnp.pad(h, ((0, 0), (0, 0), (1, 1)))
        return (jnp.einsum('oi,bil->bol', w[:, :, 0], hp[:, :, :-2])
                + jnp.einsum('oi,bil->bol', w[:, :, 1], hp[:, :, 1:-1])
                + jnp.einsum('oi,bil->bol', w[:, :, 2], hp[:, :, 2:]))

    def bn(h, g, b, m, v):
        return ((h - m[None, :, None]) / jnp.sqrt(v[None, :, None] + eps)
                * g[None, :, None] + b[None, :, None])

    h = conv1d(x, w1)
    h = jnp.maximum(bn(h, g1, b1, m1, v1), 0.0)
    h = conv1d(h, w2)
    h = bn(h, g2, b2, m2, v2)
    return x + h


if __name__ == "__main__":
    key = jax.random.PRNGKey(0)
    keys = jax.random.split(key, 11)

    # Small shapes consistent with the module: batch=2, f=8 channels, length=128.
    B, C, L = 2, 8, 128

    x = jax.random.normal(keys[0], (B, C, L), dtype=jnp.float32)

    # Conv1d(f, f, 3, bias=False) weights in PyTorch (out, in, kernel) layout.
    fan_in = C * 3
    bound = 1.0 / (fan_in ** 0.5)
    w1 = jax.random.uniform(keys[1], (C, C, 3), minval=-bound, maxval=bound, dtype=jnp.float32)
    w2 = jax.random.uniform(keys[2], (C, C, 3), minval=-bound, maxval=bound, dtype=jnp.float32)

    # BatchNorm1d(f) affine params + running stats (eval mode).
    g1 = jax.random.uniform(keys[3], (C,), minval=0.5, maxval=1.5, dtype=jnp.float32)
    b1 = 0.1 * jax.random.normal(keys[4], (C,), dtype=jnp.float32)
    m1 = 0.1 * jax.random.normal(keys[5], (C,), dtype=jnp.float32)
    v1 = jax.random.uniform(keys[6], (C,), minval=0.5, maxval=1.5, dtype=jnp.float32)
    g2 = jax.random.uniform(keys[7], (C,), minval=0.5, maxval=1.5, dtype=jnp.float32)
    b2 = 0.1 * jax.random.normal(keys[8], (C,), dtype=jnp.float32)
    m2 = 0.1 * jax.random.normal(keys[9], (C,), dtype=jnp.float32)
    v2 = jax.random.uniform(keys[10], (C,), minval=0.5, maxval=1.5, dtype=jnp.float32)

    # One-time parameter folding (BN scale -> conv weights, taps concatenated).
    W1, W2, T = fold_residual_block_params(w1, w2, g1, b1, m1, v1, g2, b2, m2, v2)

    fwd = jax.jit(residual_block_forward)
    out = jax.block_until_ready(fwd(x, W1, W2, T))

    ref = _reference(x, w1, w2, g1, b1, m1, v1, g2, b2, m2, v2)
    assert out.shape == (B, C, L), out.shape
    assert jnp.allclose(out, ref, atol=1e-4, rtol=1e-4), "mismatch vs reference"

    print("KERNEL_OK")
</pallas_src>

<mosaic_0001>
module attributes {stable_mosaic.version = 11 : i64} {
  func.func @_residual_block_kernel(%arg0: i32, %arg1: memref<8x256xf32, #tpu.memory_space<vmem>>, %arg2: memref<8x24xf32, #tpu.memory_space<vmem>>, %arg3: memref<8x24xf32, #tpu.memory_space<vmem>>, %arg4: memref<2x8x1xf32, #tpu.memory_space<vmem>>, %arg5: memref<2x1x256xf32, #tpu.memory_space<vmem>>, %arg6: memref<8x256xf32, #tpu.memory_space<vmem>>) attributes {dimension_semantics = [#tpu.dimension_semantics<parallel>], iteration_bounds = array<i64: 1>, scalar_prefetch = 0 : i64, scratch_operands = 0 : i64, tpu.core_type = #tpu.core_type<tc>, window_params = [{transform_indices = @transform_0, window_bounds = array<i64: 8, 256>}, {pipeline_mode = #tpu.pipeline_mode<synchronous>, transform_indices = @transform_1, window_bounds = array<i64: 8, 24>}, {pipeline_mode = #tpu.pipeline_mode<synchronous>, transform_indices = @transform_2, window_bounds = array<i64: 8, 24>}, {pipeline_mode = #tpu.pipeline_mode<synchronous>, transform_indices = @transform_3, window_bounds = array<i64: 2, 8, 1>}, {pipeline_mode = #tpu.pipeline_mode<synchronous>, transform_indices = @transform_4, window_bounds = array<i64: 2, 1, 256>}, {transform_indices = @transform_5, window_bounds = array<i64: 8, 256>}]} {
    %c0 = arith.constant 0 : index
    %c0_0 = arith.constant 0 : index
    %0 = vector.load %arg1[%c0, %c0_0] : memref<8x256xf32, #tpu.memory_space<vmem>>, vector<8x256xf32>
    %c0_1 = arith.constant 0 : index
    %c0_2 = arith.constant 0 : index
    %c0_3 = arith.constant 0 : index
    %1 = vector.load %arg5[%c0_1, %c0_2, %c0_3] : memref<2x1x256xf32, #tpu.memory_space<vmem>>, vector<1x1x256xf32>
    %2 = vector.shape_cast %1 : vector<1x1x256xf32> to vector<1x256xf32>
    %c1 = arith.constant 1 : index
    %c0_4 = arith.constant 0 : index
    %c0_5 = arith.constant 0 : index
    %3 = vector.load %arg5[%c1, %c0_4, %c0_5] : memref<2x1x256xf32, #tpu.memory_space<vmem>>, vector<1x1x256xf32>
    %4 = vector.shape_cast %3 : vector<1x1x256xf32> to vector<1x256xf32>
    %c1_i32 = arith.constant 1 : i32
    %5 = tpu.dynamic_rotate %0 by %c1_i32 dim 1 : vector<8x256xf32>, i32 -> vector<8x256xf32>
    %6 = vector.broadcast %2 : vector<1x256xf32> to vector<8x256xf32>
    %7 = arith.mulf %5, %6 : vector<8x256xf32>
    %c255_i32 = arith.constant 255 : i32
    %8 = tpu.dynamic_rotate %0 by %c255_i32 dim 1 : vector<8x256xf32>, i32 -> vector<8x256xf32>
    %9 = vector.broadcast %4 : vector<1x256xf32> to vector<8x256xf32>
    %10 = arith.mulf %8, %9 : vector<8x256xf32>
    %11 = tpu.concatenate %7, %0, %10 in 0 : vector<8x256xf32>, vector<8x256xf32>, vector<8x256xf32> -> vector<24x256xf32>
    %c0_6 = arith.constant 0 : index
    %c0_7 = arith.constant 0 : index
    %12 = vector.load %arg2[%c0_6, %c0_7] : memref<8x24xf32, #tpu.memory_space<vmem>>, vector<8x24xf32>
    %cst = arith.constant dense<0.000000e+00> : vector<8x256xf32>
    %13 = tpu.matmul %12, %11, %cst {dimension_numbers = #tpu.dot_dimension_numbers<[1], [0], [0], [1], [0, 0, 1, 1], [], []>} : vector<8x24xf32>, vector<24x256xf32>, vector<8x256xf32> -> vector<8x256xf32>
    %c0_8 = arith.constant 0 : index
    %c0_9 = arith.constant 0 : index
    %c0_10 = arith.constant 0 : index
    %14 = vector.load %arg4[%c0_8, %c0_9, %c0_10] : memref<2x8x1xf32, #tpu.memory_space<vmem>>, vector<1x8x1xf32>
    %15 = vector.shape_cast %14 : vector<1x8x1xf32> to vector<8x1xf32>
    %16 = vector.broadcast %15 : vector<8x1xf32> to vector<8x256xf32>
    %17 = arith.addf %13, %16 : vector<8x256xf32>
    %cst_11 = arith.constant 0.000000e+00 : f32
    %18 = vector.broadcast %cst_11 : f32 to vector<8x256xf32>
    %19 = arith.maximumf %17, %18 : vector<8x256xf32>
    %c1_i32_12 = arith.constant 1 : i32
    %20 = tpu.dynamic_rotate %19 by %c1_i32_12 dim 1 : vector<8x256xf32>, i32 -> vector<8x256xf32>
    %21 = vector.broadcast %2 : vector<1x256xf32> to vector<8x256xf32>
    %22 = arith.mulf %20, %21 : vector<8x256xf32>
    %c255_i32_13 = arith.constant 255 : i32
    %23 = tpu.dynamic_rotate %19 by %c255_i32_13 dim 1 : vector<8x256xf32>, i32 -> vector<8x256xf32>
    %24 = vector.broadcast %4 : vector<1x256xf32> to vector<8x256xf32>
    %25 = arith.mulf %23, %24 : vector<8x256xf32>
    %26 = tpu.concatenate %22, %19, %25 in 0 : vector<8x256xf32>, vector<8x256xf32>, vector<8x256xf32> -> vector<24x256xf32>
    %c0_14 = arith.constant 0 : index
    %c0_15 = arith.constant 0 : index
    %27 = vector.load %arg3[%c0_14, %c0_15] : memref<8x24xf32, #tpu.memory_space<vmem>>, vector<8x24xf32>
    %cst_16 = arith.constant dense<0.000000e+00> : vector<8x256xf32>
    %28 = tpu.matmul %27, %26, %cst_16 {dimension_numbers = #tpu.dot_dimension_numbers<[1], [0], [0], [1], [0, 0, 1, 1], [], []>} : vector<8x24xf32>, vector<24x256xf32>, vector<8x256xf32> -> vector<8x256xf32>
    %29 = arith.addf %0, %28 : vector<8x256xf32>
    %c1_17 = arith.constant 1 : index
    %c0_18 = arith.constant 0 : index
    %c0_19 = arith.constant 0 : index
    %30 = vector.load %arg4[%c1_17, %c0_18, %c0_19] : memref<2x8x1xf32, #tpu.memory_space<vmem>>, vector<1x8x1xf32>
    %31 = vector.shape_cast %30 : vector<1x8x1xf32> to vector<8x1xf32>
    %32 = vector.broadcast %31 : vector<8x1xf32> to vector<8x256xf32>
    %33 = arith.addf %29, %32 : vector<8x256xf32>
    %c0_20 = arith.constant 0 : index
    %c0_21 = arith.constant 0 : index
    %34 = vector.load %arg6[%c0_20, %c0_21] : memref<8x256xf32, #tpu.memory_space<vmem>>, vector<8x256xf32>
    tpu.vector_store %arg6[%c0_20, %c0_21], %33 {strides = array<i32>} : memref<8x256xf32, #tpu.memory_space<vmem>>, vector<8x256xf32>,
    return
  }
  func.func @transform_0(%arg0: i32) -> (i32, i32) {
    %c0_i32 = arith.constant 0 : i32
    %c0_i32_0 = arith.constant 0 : i32
    return %c0_i32, %arg0 : i32, i32
  }
  func.func @transform_1(%arg0: i32) -> (i32, i32) {
    %c0_i32 = arith.constant 0 : i32
    %c0_i32_0 = arith.constant 0 : i32
    %c0_i32_1 = arith.constant 0 : i32
    return %c0_i32, %c0_i32_0 : i32, i32
  }
  func.func @transform_2(%arg0: i32) -> (i32, i32) {
    %c0_i32 = arith.constant 0 : i32
    %c0_i32_0 = arith.constant 0 : i32
    %c0_i32_1 = arith.constant 0 : i32
    return %c0_i32, %c0_i32_0 : i32, i32
  }
  func.func @transform_3(%arg0: i32) -> (i32, i32, i32) {
    %c0_i32 = arith.constant 0 : i32
    %c0_i32_0 = arith.constant 0 : i32
    %c0_i32_1 = arith.constant 0 : i32
    %c0_i32_2 = arith.constant 0 : i32
    return %c0_i32, %c0_i32_0, %c0_i32_1 : i32, i32, i32
  }
  func.func @transform_4(%arg0: i32) -> (i32, i32, i32) {
    %c0_i32 = arith.constant 0 : i32
    %c0_i32_0 = arith.constant 0 : i32
    %c0_i32_1 = arith.constant 0 : i32
    %c0_i32_2 = arith.constant 0 : i32
    return %c0_i32, %c0_i32_0, %c0_i32_1 : i32, i32, i32
  }
  func.func @transform_5(%arg0: i32) -> (i32, i32) {
    %c0_i32 = arith.constant 0 : i32
    %c0_i32_0 = arith.constant 0 : i32
    return %c0_i32, %arg0 : i32, i32
  }
}

</mosaic_0001>

<llo_original>
// kernel: residual_block_forward.1
$region0: #{residual_block_forward.1}
  #allocation0 [shape = 'u32[]', space=smem, size = 0x4, offset = 0x4, fixed_abs, tag = 'smem constant byte address 0x4 - core index']
  #allocation1 [shape = 'u32[144,128]{1,0:T(1,128)}', space=vmem, size = 0x12000, scoped, tag = 'internal scratch']
  %s0 = inlined_call_operand.vmem [shape: f32[8,256], index: 0, kind: input, shape index: {}]
  %s1 = inlined_call_operand.vmem [shape: f32[8,24], index: 1, kind: input, shape index: {}]
  %s2 = inlined_call_operand.vmem [shape: f32[8,24], index: 2, kind: input, shape index: {}]
  %s3 = inlined_call_operand.vmem [shape: f32[2,8,1], index: 3, kind: input, shape index: {}]
  %s4 = inlined_call_operand.vmem [shape: f32[2,1,256], index: 4, kind: input, shape index: {}]
  %s5 = inlined_call_operand.hbm [shape: f32[8,256], index: 5, kind: output, shape index: {}]
  %s6 = sld [smem:[#allocation0]]
  $region30: #{residual_block_forward.1} parent=0
    _
  %s8 = ssub.s32 1, %s6
  %s9 = scalar_select 0, %s8, %s6
  $region1: #{residual_block_forward.1} parent=0
    #allocation2 [shape = 'u8[8192]{0}', space=vmem, size = 0x2000, scoped, tag = 'output window, operand 0, single buffered']
    #allocation3 [shape = 's32[1]{0}', space=sflag, size = 0x4, scoped, tag = 'scoped memory for residual_block_forward.1']
    %10 = vsyncpa [#allocation3], 0
    // Predicated region
    $region2: #{residual_block_forward.1} parent=1 // pred_check
      _
    $region3: #{residual_block_forward.1} parent=1 // pred_check_branch
      %12 = sbr.rel (0) target = $region5
    $region4: #{residual_block_forward.1} parent=1 // pred_region
      _
    $region5: #{residual_block_forward.1} parent=1 // pred_fallthru
      _
    // Predicated region
    $region6: #{residual_block_forward.1} parent=1 // pred_check
      _
    $region7: #{residual_block_forward.1} parent=1 // pred_check_branch
      %14 = sbr.rel (0) target = $region9
    $region8: #{residual_block_forward.1} parent=1 // pred_region
      _
    $region9: #{residual_block_forward.1} parent=1 // pred_fallthru
      _
    // Predicated region
    $region10: #{residual_block_forward.1} parent=1 // pred_check
      _
    $region11: #{residual_block_forward.1} parent=1 // pred_check_branch
      %16 = sbr.rel (0) target = $region13
    $region12: #{residual_block_forward.1} parent=1 // pred_region
      _
    $region13: #{residual_block_forward.1} parent=1 // pred_fallthru
      _
    // Predicated region
    $region14: #{residual_block_forward.1} parent=1 // pred_check
      _
    $region15: #{residual_block_forward.1} parent=1 // pred_check_branch
      %18 = sbr.rel (0) target = $region17
    $region16: #{residual_block_forward.1} parent=1 // pred_region
      _
    $region17: #{residual_block_forward.1} parent=1 // pred_fallthru
      _
    // Predicated region
    $region18: #{residual_block_forward.1} parent=1 // pred_check
      _
    $region19: #{residual_block_forward.1} parent=1 // pred_check_branch
      %20 = sbr.rel (0) target = $region21
    $region20: #{residual_block_forward.1} parent=1 // pred_region
      _
    $region21: #{residual_block_forward.1} parent=1 // pred_fallthru
      _
    %v21 = vld [vmem:[%s0] sm:$0xff]
    %v22 = vld [vmem:[%s0 + $0x8] sm:$0xff]
    %v23 = vld [vmem:[%s4] sm:$0x3]
    %s24 = scalar_lea.vmem %s4, 2
    %v25 = vld [vmem:[%s24] sm:$0x3]
    %26 = vrot.lane.b32.xlu0 %v21, 1
    %v27 = vpop.permute.xlu0 %26
    %28 = vrot.lane.b32.xlu0 %v22, 1
    %v29 = vpop.permute.xlu0 %28
    %v30 = vlaneseq
    %v31 = vand.u32 %v30, 127
    %vm32 = vcmp.lt.s32.totalorder %v31, 1
    %v33 = vsel %vm32, %v27, %v29
    %v34 = vsel %vm32, %v29, %v27
    %v36 = vlaneseq
    %v37 = vshrl.u32 %v36, 7
    %v38 = vsub.s32 0, %v37
    %v39 = vrot.slane %v23, %v38
    %v40 = vlaneseq
    %v41 = vshrl.u32 %v40, 7
    %v42 = vsub.s32 1, %v41
    %v43 = vrot.slane %v23, %v42
    %v46 = vmul.f32 %v34, %v39
    %v47 = vmul.f32 %v33, %v43
    %48 = vrot.lane.b32.xlu0 %v21, 127
    %v49 = vpop.permute.xlu0 %48
    %50 = vrot.lane.b32.xlu0 %v22, 127
    %v51 = vpop.permute.xlu0 %50
    %vm52 = vcmp.lt.s32.totalorder %v31, 127
    %v53 = vsel %vm52, %v49, %v51
    %v54 = vsel %vm52, %v51, %v49
    %v56 = vlaneseq
    %v57 = vshrl.u32 %v56, 7
    %v58 = vsub.s32 0, %v57
    %v59 = vrot.slane %v25, %v58
    %v60 = vlaneseq
    %v61 = vshrl.u32 %v60, 7
    %v62 = vsub.s32 1, %v61
    %v63 = vrot.slane %v25, %v62
    %v66 = vmul.f32 %v53, %v59
    %v67 = vmul.f32 %v54, %v63
    %v68 = vld [vmem:[%s1] sm:$0xff]
    %v69 = vld [vmem:[%s3] sm:$0xff]
    %71 = vset.pattern.permute.xlu0 0
    %72 = vperm.xlu0 %71, %v69
    %v73 = vpop.permute.xlu0 %72
    %vm75 = vcmask 195584
    %v77 = vsel %vm75, %v68, 0
    %79 = vmatprep.subr.mxu0 %v47
    %80 = vmatpush1.msra.mxu0 %v46
    %81 = vmatprep.subr.mxu0 %v22
    %82 = vmatpush1.msra.mxu0 %v21
    %83 = vmatprep.subr.mxu0 %v67
    %84 = vmatpush1.msra.mxu0 %v66
    %85 = vmatprep.subr.mxu0 0.0
    %86 = vmatpush1.msra.mxu0 0.0
    %87 = vmatprep.subr.mxu0 0.0
    %88 = vmatpush1.msra.mxu0 0.0
    %89 = vmatprep.subr.mxu0 0.0
    %90 = vmatpush1.msra.mxu0 0.0
    %91 = vmatprep.subr.mxu0 0.0
    %92 = vmatpush1.msra.mxu0 0.0
    %93 = vmatprep.subr.mxu0 0.0
    %94 = vmatpush1.msra.mxu0 0.0
    %95 = vmatprep.subr.mxu0 0.0
    %96 = vmatpush1.msra.mxu0 0.0
    %97 = vmatprep.subr.mxu0 0.0
    %98 = vmatpush1.msra.mxu0 0.0
    %99 = vmatprep.subr.mxu0 0.0
    %100 = vmatpush1.msra.mxu0 0.0
    %101 = vmatprep.subr.mxu0 0.0
    %102 = vmatpush1.msra.mxu0 0.0
    %103 = vmatprep.subr.mxu0 0.0
    %104 = vmatpush1.msra.mxu0 0.0
    %105 = vmatprep.subr.mxu0 0.0
    %106 = vmatpush1.msra.mxu0 0.0
    %107 = vmatprep.subr.mxu0 0.0
    %108 = vmatpush1.msra.mxu0 0.0
    %109 = vmatprep.subr.mxu0 0.0
    %110 = vmatpush1.msra.mxu0 0.0
    %111 = vmatprep.subr.mxu0 0.0
    %112 = vmatpush1.msra.mxu0 0.0
    %113 = vmatprep.subr.mxu0 0.0
    %114 = vmatpush1.msra.mxu0 0.0
    %115 = vmatprep.subr.mxu0 0.0
    %116 = vmatpush1.msra.mxu0 0.0
    %117 = vmatprep.subr.mxu0 0.0
    %118 = vmatpush1.msra.mxu0 0.0
    %119 = vmatprep.subr.mxu0 0.0
    %120 = vmatpush1.msra.mxu0 0.0
    %121 = vmatprep.subr.mxu0 0.0
    %122 = vmatpush1.msra.mxu0 0.0
    %123 = vmatprep.subr.mxu0 0.0
    %124 = vmatpush1.msra.mxu0 0.0
    %125 = vmatprep.subr.mxu0 0.0
    %126 = vmatpush1.msra.mxu0 0.0
    %127 = vmatprep.subr.mxu0 0.0
    %128 = vmatpush1.msra.mxu0 0.0
    %129 = vmatprep.subr.mxu0 0.0
    %130 = vmatpush1.msra.mxu0 0.0
    %131 = vmatprep.subr.mxu0 0.0
    %132 = vmatpush1.msra.mxu0 0.0
    %133 = vmatprep.subr.mxu0 0.0
    %134 = vmatpush1.msra.mxu0 0.0
    %135 = vmatprep.subr.mxu0 0.0
    %136 = vmatpush1.msra.mxu0 0.0
    %137 = vmatprep.subr.mxu0 0.0
    %138 = vmatpush1.msra.mxu0 0.0
    %139 = vmatprep.subr.mxu0 0.0
    %140 = vmatpush1.msra.mxu0 0.0
    %141 = vmatprep.subr.mxu0 0.0
    %142 = vmatpush1.msra.mxu0 0.0
    %143 = vmatprep.mubr.f32.mxu0 0.0
    %144 = vmatmul.mubr.f32.gmra.mrb[0].mxu0 %v77
    %v145 = vpop.f32.mrb[0].mxu0
    %v146 = vadd.f32 %v73, %v145
    %v147 = vpop.f32.mrb[0].mxu0
    %v148 = vadd.f32 %v73, %v147
    %149 = vdwg.mxu0
    %v150 = vmax.f32 %v146, 0.0
    %v151 = vmax.f32 %v148, 0.0
    %152 = vrot.lane.b32.xlu0 %v150, 1
    %v153 = vpop.permute.xlu0 %152
    %154 = vrot.lane.b32.xlu0 %v151, 1
    %v155 = vpop.permute.xlu0 %154
    %v156 = vsel %vm32, %v153, %v155
    %v157 = vsel %vm32, %v155, %v153
    %v158 = vmul.f32 %v157, %v39
    %v159 = vmul.f32 %v156, %v43
    %160 = vrot.lane.b32.xlu0 %v150, 127
    %v161 = vpop.permute.xlu0 %160
    %162 = vrot.lane.b32.xlu0 %v151, 127
    %v163 = vpop.permute.xlu0 %162
    %v164 = vsel %vm52, %v161, %v163
    %v165 = vsel %vm52, %v163, %v161
    %v166 = vmul.f32 %v164, %v59
    %v167 = vmul.f32 %v165, %v63
    %v168 = vld [vmem:[%s2] sm:$0xff]
    %v170 = vsel %vm75, %v168, 0
    %172 = vmatprep.subr.mxu0 %v159
    %173 = vmatpush1.msra.mxu0 %v158
    %174 = vmatprep.subr.mxu0 %v151
    %175 = vmatpush1.msra.mxu0 %v150
    %176 = vmatprep.subr.mxu0 %v167
    %177 = vmatpush1.msra.mxu0 %v166
    %178 = vmatprep.subr.mxu0 0.0
    %179 = vmatpush1.msra.mxu0 0.0
    %180 = vmatprep.subr.mxu0 0.0
    %181 = vmatpush1.msra.mxu0 0.0
    %182 = vmatprep.subr.mxu0 0.0
    %183 = vmatpush1.msra.mxu0 0.0
    %184 = vmatprep.subr.mxu0 0.0
    %185 = vmatpush1.msra.mxu0 0.0
    %186 = vmatprep.subr.mxu0 0.0
    %187 = vmatpush1.msra.mxu0 0.0
    %188 = vmatprep.subr.mxu0 0.0
    %189 = vmatpush1.msra.mxu0 0.0
    %190 = vmatprep.subr.mxu0 0.0
    %191 = vmatpush1.msra.mxu0 0.0
    %192 = vmatprep.subr.mxu0 0.0
    %193 = vmatpush1.msra.mxu0 0.0
    %194 = vmatprep.subr.mxu0 0.0
    %195 = vmatpush1.msra.mxu0 0.0
    %196 = vmatprep.subr.mxu0 0.0
    %197 = vmatpush1.msra.mxu0 0.0
    %198 = vmatprep.subr.mxu0 0.0
    %199 = vmatpush1.msra.mxu0 0.0
    %200 = vmatprep.subr.mxu0 0.0
    %201 = vmatpush1.msra.mxu0 0.0
    %202 = vmatprep.subr.mxu0 0.0
    %203 = vmatpush1.msra.mxu0 0.0
    %204 = vmatprep.subr.mxu0 0.0
    %205 = vmatpush1.msra.mxu0 0.0
    %206 = vmatprep.subr.mxu0 0.0
    %207 = vmatpush1.msra.mxu0 0.0
    %208 = vmatprep.subr.mxu0 0.0
    %209 = vmatpush1.msra.mxu0 0.0
    %210 = vmatprep.subr.mxu0 0.0
    %211 = vmatpush1.msra.mxu0 0.0
    %212 = vmatprep.subr.mxu0 0.0
    %213 = vmatpush1.msra.mxu0 0.0
    %214 = vmatprep.subr.mxu0 0.0
    %215 = vmatpush1.msra.mxu0 0.0
    %216 = vmatprep.subr.mxu0 0.0
    %217 = vmatpush1.msra.mxu0 0.0
    %218 = vmatprep.subr.mxu0 0.0
    %219 = vmatpush1.msra.mxu0 0.0
    %220 = vmatprep.subr.mxu0 0.0
    %221 = vmatpush1.msra.mxu0 0.0
    %222 = vmatprep.subr.mxu0 0.0
    %223 = vmatpush1.msra.mxu0 0.0
    %224 = vmatprep.subr.mxu0 0.0
    %225 = vmatpush1.msra.mxu0 0.0
    %226 = vmatprep.subr.mxu0 0.0
    %227 = vmatpush1.msra.mxu0 0.0
    %228 = vmatprep.subr.mxu0 0.0
    %229 = vmatpush1.msra.mxu0 0.0
    %230 = vmatprep.subr.mxu0 0.0
    %231 = vmatpush1.msra.mxu0 0.0
    %232 = vmatprep.subr.mxu0 0.0
    %233 = vmatpush1.msra.mxu0 0.0
    %234 = vmatprep.subr.mxu0 0.0
    %235 = vmatpush1.msra.mxu0 0.0
    %236 = vmatprep.mubr.f32.mxu0 0.0
    %237 = vmatmul.mubr.f32.gmra.mrb[0].mxu0 %v170
    %v238 = vpop.f32.mrb[0].mxu0
    %v239 = vadd.f32 0.0, %v238
    %v240 = vpop.f32.mrb[0].mxu0
    %v241 = vadd.f32 0.0, %v240
    %242 = vdwg.mxu0
    %v243 = vadd.f32 %v21, %v239
    %v244 = vadd.f32 %v22, %v241
    %s245 = scalar_lea.vmem %s3, 8
    %v246 = vld [vmem:[%s245] sm:$0xff]
    %248 = vset.pattern.permute.xlu0 0
    %249 = vperm.xlu0 %248, %v246
    %v250 = vpop.permute.xlu0 %249
    %v252 = vadd.f32 %v243, %v250
    %v253 = vadd.f32 %v244, %v250
    %254 = vst [vmem:[#allocation2] sm:$0xff] %v252
    %255 = vst [vmem:[#allocation2 + $0x8] sm:$0xff] %v253
    // Predicated region
    $region22: #{residual_block_forward.1} parent=1 // pred_check
      _
    $region23: #{residual_block_forward.1} parent=1 // pred_check_branch
      %257 = sbr.rel (0) target = $region25
    $region24: #{residual_block_forward.1} parent=1 // pred_region
      %s259 = ssub.s32 256, 256
      %260 = vsyncadd [#allocation3], %s259
      %s262 = sshll.u32 [#allocation2], 4
      %s263 = int_to_ptr.vmem [resolvable:$true] %s262
      %265 = dma.vmem_to_hbm [thread:$0]  %s263, 256, %s5, [#allocation3]
    $region25: #{residual_block_forward.1} parent=1 // pred_fallthru
      _
    // Predicated region
    $region26: #{residual_block_forward.1} parent=1 // pred_check
      _
    $region27: #{residual_block_forward.1} parent=1 // pred_check_branch
      %267 = sbr.rel (0) target = $region29
    $region28: #{residual_block_forward.1} parent=1 // pred_region
      %268 = dma.done [#allocation3], 256
    $region29: #{residual_block_forward.1} parent=1 // pred_fallthru
      _
    %269 = vsyncpa [#allocation3], 1

</llo_original>
